<compile_context>
chip_gen: v6e
topology: v6e:2x2x1
jax: 0.10.0
libtpu: 0.0.40
codegen_flags: <defaults>
</compile_context>

<pallas_src>
import functools

import jax
import jax.numpy as jnp
from jax.experimental import pallas as pl
from jax.experimental.pallas import tpu as pltpu

LANE = 128


def _round_up(v, m):
    return ((v + m - 1) // m) * m


# --------------------------------------------------------------------------------------
# Fused Pallas kernel: all GCN layers + global mean pool + linear head.
# grid = (layer, node_row_tile).  H and XW persist in VMEM scratch across the grid.
# --------------------------------------------------------------------------------------
def _fused_gcn_kernel(a_ref, x_ref, w_ref, b_ref, p_ref, wlin_ref, blin_ref,
                      out_ref, h_ref, xw_ref, *, tm):
    l = pl.program_id(0)                 # layer index (outer, sequential)
    i = pl.program_id(1)                 # node-row tile index (inner)
    n_layers = pl.num_programs(0)
    n_tiles = pl.num_programs(1)

    # Seed the resident activation buffer with the (padded, bf16) node features.
    @pl.when((l == 0) & (i == 0))
    def _():
        h_ref[...] = x_ref[...]

    # Once per layer: XW = H_{l-1} @ W_l (f32 accumulation on the MXU, stored bf16).
    @pl.when(i == 0)
    def _():
        xw = jnp.dot(h_ref[...], w_ref[...], preferred_element_type=jnp.float32)
        xw_ref[...] = xw.astype(xw_ref.dtype)

    # Row slab of the aggregation: H_l[rows] = A_hat[rows, :] @ XW + b (+ReLU except last).
    acc = jnp.dot(a_ref[...], xw_ref[...], preferred_element_type=jnp.float32)
    acc = acc + b_ref[...]                                   # (1, 128) f32 bias broadcast
    acc = jnp.where(l < n_layers - 1, jnp.maximum(acc, 0.0), acc)
    row0 = pl.multiple_of(i * tm, tm)
    h_ref[pl.ds(row0, tm), :] = acc.astype(h_ref.dtype)

    # Finalize: fused global-mean-pool + classifier head, one lane-dense (8,128) store.
    @pl.when((l == n_layers - 1) & (i == n_tiles - 1))
    def _():
        pooled = jnp.dot(p_ref[...], h_ref[...], preferred_element_type=jnp.float32)
        logits = jnp.dot(pooled.astype(wlin_ref.dtype), wlin_ref[...],
                         preferred_element_type=jnp.float32) + blin_ref[...]
        out_ref[...] = logits


# --------------------------------------------------------------------------------------
# JAX glue: graph -> dense normalized adjacency, batch -> mean-pool matrix, params
# --------------------------------------------------------------------------------------
def build_norm_adj(edge_index, num_nodes, edge_weight=None):
    src = edge_index[0]
    dst = edge_index[1]
    if edge_weight is None:
        edge_weight = jnp.ones(src.shape[0], dtype=jnp.float32)
    a = jnp.zeros((num_nodes, num_nodes), jnp.float32)
    a = a.at[dst, src].add(edge_weight)                 # message j -> i lands in row i
    a = a + jnp.eye(num_nodes, dtype=jnp.float32)       # add_self_loops (weight 1.0)
    deg = a.sum(axis=1)
    d_inv_sqrt = jnp.where(deg > 0, jax.lax.rsqrt(deg), 0.0)
    return d_inv_sqrt[:, None] * a * d_inv_sqrt[None, :]


def build_pool_mat(batch, num_graphs):
    onehot = (batch[None, :] == jnp.arange(num_graphs)[:, None]).astype(jnp.float32)
    counts = onehot.sum(axis=1, keepdims=True)
    return onehot / jnp.maximum(counts, 1.0)


def init_params(key, num_node_features, hidden_channels, layers_nr, num_classes):
    dims = [num_node_features] + [hidden_channels] * layers_nr
    conv_w, conv_b = [], []
    keys = jax.random.split(key, layers_nr + 1)
    for i in range(layers_nr):
        fan_in, fan_out = dims[i], dims[i + 1]
        scale = jnp.sqrt(6.0 / (fan_in + fan_out))      # glorot-like, deterministic
        conv_w.append(jax.random.uniform(keys[i], (fan_in, fan_out),
                                         jnp.float32, -scale, scale))
        conv_b.append(jnp.zeros((fan_out,), jnp.float32))
    scale = jnp.sqrt(6.0 / (hidden_channels + num_classes))
    lin_w = jax.random.uniform(keys[-1], (hidden_channels, num_classes),
                               jnp.float32, -scale, scale)
    lin_b = jnp.zeros((num_classes,), jnp.float32)
    return {"conv_w": conv_w, "conv_b": conv_b, "lin_w": lin_w, "lin_b": lin_b}


# --------------------------------------------------------------------------------------
# Forward pass (Pallas)
# --------------------------------------------------------------------------------------
def gcn_forward(params, x, edge_index, batch, num_graphs, edge_weight=None,
                row_tile=256):
    conv_w, conv_b = params["conv_w"], params["conv_b"]
    lin_w, lin_b = params["lin_w"], params["lin_b"]
    n_layers = len(conv_w)

    n, f_in = x.shape
    hidden = conv_w[0].shape[1]
    n_classes = lin_w.shape[1]

    fdim = _round_up(max(f_in, hidden, n_classes), LANE)   # unified lane-dense width
    tm = min(row_tile, _round_up(n, LANE))                 # node row-tile (mult of 128)
    n_pad = _round_up(n, tm)
    g_pad = _round_up(num_graphs, 8)
    n_tiles = n_pad // tm

    # JAX glue (cheap relative to the matmuls; scheduled around the kernel via CostEstimate).
    a_hat = build_norm_adj(edge_index, n, edge_weight)
    pool_mat = build_pool_mat(batch, num_graphs)

    def pad2(m, r, c):
        return jnp.pad(m, ((0, r - m.shape[0]), (0, c - m.shape[1])))

    a_p = pad2(a_hat, n_pad, n_pad).astype(jnp.bfloat16)
    x_p = pad2(x, n_pad, fdim).astype(jnp.bfloat16)
    w_stack = jnp.stack([pad2(w, fdim, fdim) for w in conv_w]).astype(jnp.bfloat16)
    b_stack = jnp.stack([jnp.pad(b, (0, fdim - b.shape[0]))[None, :]
                         for b in conv_b]).astype(jnp.float32)
    p_p = pad2(pool_mat, g_pad, n_pad).astype(jnp.bfloat16)
    wlin_p = pad2(lin_w, fdim, fdim).astype(jnp.bfloat16)
    blin_p = jnp.pad(lin_b, (0, fdim - lin_b.shape[0]))[None, :].astype(jnp.float32)

    kernel = functools.partial(_fused_gcn_kernel, tm=tm)

    flops = 2 * n_layers * (n_pad * fdim * fdim + n_pad * n_pad * fdim)
    flops += 2 * (g_pad * n_pad * fdim + g_pad * fdim * fdim)
    bytes_accessed = (n_layers * n_pad * n_pad * 2      # A_hat re-streamed per layer
                      + n_pad * fdim * 2                # X
                      + n_layers * fdim * fdim * 2      # conv weights
                      + g_pad * n_pad * 2               # pool matrix
                      + fdim * fdim * 2                 # lin weight
                      + g_pad * fdim * 4)               # logits

    vmem_est = (2 * tm * n_pad * 2          # A row slab, double-buffered
                + 2 * n_pad * fdim * 2      # X
                + 2 * fdim * fdim * 2       # per-layer W block
                + 2 * g_pad * n_pad * 2     # pool matrix
                + 2 * n_pad * fdim * 2      # H scratch
                + 2 * n_pad * fdim * 2      # XW scratch
                + 8 * fdim * fdim)          # misc (bias, lin, out, headroom)
    vmem_limit = int(min(max(2 * vmem_est, 8 << 20), 64 << 20))   # cap for v7x 64 MiB

    out_pad = pl.pallas_call(
        kernel,
        out_shape=jax.ShapeDtypeStruct((g_pad, fdim), jnp.float32),
        grid_spec=pltpu.PrefetchScalarGridSpec(
            num_scalar_prefetch=0,
            grid=(n_layers, n_tiles),
            in_specs=[
                pl.BlockSpec((tm, n_pad), lambda l, i: (i, 0)),                    # A_hat row slab
                pl.BlockSpec((n_pad, fdim), lambda l, i: (0, 0)),                  # X (resident)
                pl.BlockSpec((pl.Squeezed(), fdim, fdim), lambda l, i: (l, 0, 0)), # W_l
                pl.BlockSpec((pl.Squeezed(), 1, fdim), lambda l, i: (l, 0, 0)),    # b_l
                pl.BlockSpec((g_pad, n_pad), lambda l, i: (0, 0)),                 # pool matrix
                pl.BlockSpec((fdim, fdim), lambda l, i: (0, 0)),                   # lin W
                pl.BlockSpec((1, fdim), lambda l, i: (0, 0)),                      # lin b
            ],
            out_specs=pl.BlockSpec((g_pad, fdim), lambda l, i: (0, 0)),
            scratch_shapes=[
                pltpu.VMEM((n_pad, fdim), jnp.bfloat16),   # H (carried across layers)
                pltpu.VMEM((n_pad, fdim), jnp.bfloat16),   # XW (recomputed per layer)
            ],
        ),
        compiler_params=pltpu.CompilerParams(
            # Row tiles write a shared VMEM H buffer and layers are sequential -> "arbitrary".
            # TODO(synk): on v7x, shard row tiles across the 2 TCs (core_map + shared H).
            dimension_semantics=("arbitrary", "arbitrary"),
            vmem_limit_bytes=vmem_limit,
        ),
        cost_estimate=pl.CostEstimate(flops=flops, transcendentals=0,
                                      bytes_accessed=bytes_accessed),
    )(a_p, x_p, w_stack, b_stack, p_p, wlin_p, blin_p)

    # F.dropout(p=0.2) is identity at inference time (training == False).
    # TODO(synk): add stochastic dropout via pltpu.prng_random_bits if training mode is needed.
    return out_pad[:num_graphs, :n_classes]


def gcn_forward_ref(params, x, edge_index, batch, num_graphs, edge_weight=None):
    """Pure-JAX f32 reference for a sanity check."""
    a_hat = build_norm_adj(edge_index, x.shape[0], edge_weight)
    h = x
    n_layers = len(params["conv_w"])
    for i in range(n_layers):
        h = a_hat @ (h @ params["conv_w"][i]) + params["conv_b"][i]
        if i < n_layers - 1:
            h = jnp.maximum(h, 0.0)
    pool_mat = build_pool_mat(batch, num_graphs)
    return (pool_mat @ h) @ params["lin_w"] + params["lin_b"]


# --------------------------------------------------------------------------------------
if __name__ == "__main__":
    key = jax.random.PRNGKey(0)
    k_x, k_e, k_p = jax.random.split(key, 3)

    # Small synthetic batched graph: 4 graphs x 16 nodes = 64 nodes total.
    num_nodes = 64
    num_edges = 128
    num_node_features = 16
    hidden_channels = 32
    layers_nr = 3
    num_classes = 8
    num_graphs = 4

    x = jax.random.normal(k_x, (num_nodes, num_node_features), jnp.float32)
    edge_index = jax.random.randint(k_e, (2, num_edges), 0, num_nodes, jnp.int32)
    batch = jnp.repeat(jnp.arange(num_graphs, dtype=jnp.int32),
                       num_nodes // num_graphs)

    params = init_params(k_p, num_node_features, hidden_channels, layers_nr, num_classes)

    out = gcn_forward(params, x, edge_index, batch, num_graphs)
    out = jax.block_until_ready(out)

    ref = gcn_forward_ref(params, x, edge_index, batch, num_graphs)
    assert out.shape == (num_graphs, num_classes)
    # bf16 matmul inputs with f32 accumulation -> keep a relaxed tolerance vs the f32 ref.
    assert jnp.allclose(out, ref, rtol=5e-2, atol=5e-2), (out, ref)

    print("KERNEL_OK")
</pallas_src>

<mosaic_0001>
module attributes {stable_mosaic.version = 11 : i64} {
  func.func @_fused_gcn_kernel(%arg0: i32, %arg1: i32, %arg2: memref<128x128xbf16, #tpu.memory_space<vmem>>, %arg3: memref<128x128xbf16, #tpu.memory_space<vmem>>, %arg4: memref<1x128x128xbf16, #tpu.memory_space<vmem>>, %arg5: memref<1x1x128xf32, #tpu.memory_space<vmem>>, %arg6: memref<8x128xbf16, #tpu.memory_space<vmem>>, %arg7: memref<128x128xbf16, #tpu.memory_space<vmem>>, %arg8: memref<1x128xf32, #tpu.memory_space<vmem>>, %arg9: memref<8x128xf32, #tpu.memory_space<vmem>>, %arg10: memref<128x128xbf16, #tpu.memory_space<vmem>>, %arg11: memref<128x128xbf16, #tpu.memory_space<vmem>>) attributes {dimension_semantics = [#tpu.dimension_semantics<arbitrary>, #tpu.dimension_semantics<arbitrary>], iteration_bounds = array<i64: 3, 1>, scalar_prefetch = 0 : i64, scratch_operands = 2 : i64, tpu.core_type = #tpu.core_type<tc>, window_params = [{transform_indices = @transform_0, window_bounds = array<i64: 128, 128>}, {pipeline_mode = #tpu.pipeline_mode<synchronous>, transform_indices = @transform_1, window_bounds = array<i64: 128, 128>}, {transform_indices = @transform_2, window_bounds = array<i64: 1, 128, 128>}, {transform_indices = @transform_3, window_bounds = array<i64: 1, 1, 128>}, {pipeline_mode = #tpu.pipeline_mode<synchronous>, transform_indices = @transform_4, window_bounds = array<i64: 8, 128>}, {pipeline_mode = #tpu.pipeline_mode<synchronous>, transform_indices = @transform_5, window_bounds = array<i64: 128, 128>}, {pipeline_mode = #tpu.pipeline_mode<synchronous>, transform_indices = @transform_6, window_bounds = array<i64: 1, 128>}, {pipeline_mode = #tpu.pipeline_mode<synchronous>, transform_indices = @transform_7, window_bounds = array<i64: 8, 128>}]} {
    %c0_i32 = arith.constant 0 : i32
    %0 = arith.cmpi eq, %arg0, %c0_i32 : i32
    %c0_i32_0 = arith.constant 0 : i32
    %1 = arith.cmpi eq, %arg1, %c0_i32_0 : i32
    %2 = arith.andi %0, %1 : i1
    %3 = arith.extui %2 : i1 to i32
    %c0_i32_1 = arith.constant 0 : i32
    %4 = arith.cmpi ne, %3, %c0_i32_1 : i32
    scf.if %4 {
      %c0_15 = arith.constant 0 : index
      %c0_16 = arith.constant 0 : index
      %29 = vector.load %arg3[%c0_15, %c0_16] : memref<128x128xbf16, #tpu.memory_space<vmem>>, vector<128x128xbf16>
      %c0_17 = arith.constant 0 : index
      %c0_18 = arith.constant 0 : index
      %30 = vector.load %arg10[%c0_17, %c0_18] : memref<128x128xbf16, #tpu.memory_space<vmem>>, vector<128x128xbf16>
      tpu.vector_store %arg10[%c0_17, %c0_18], %29 {strides = array<i32>} : memref<128x128xbf16, #tpu.memory_space<vmem>>, vector<128x128xbf16>,
    } else {
    }
    %c0_i32_2 = arith.constant 0 : i32
    %5 = arith.cmpi eq, %arg1, %c0_i32_2 : i32
    %6 = arith.extui %5 : i1 to i32
    %c0_i32_3 = arith.constant 0 : i32
    %7 = arith.cmpi ne, %6, %c0_i32_3 : i32
    scf.if %7 {
      %c0_15 = arith.constant 0 : index
      %c0_16 = arith.constant 0 : index
      %29 = vector.load %arg10[%c0_15, %c0_16] : memref<128x128xbf16, #tpu.memory_space<vmem>>, vector<128x128xbf16>
      %c0_17 = arith.constant 0 : index
      %c0_18 = arith.constant 0 : index
      %c0_19 = arith.constant 0 : index
      %30 = vector.load %arg4[%c0_17, %c0_18, %c0_19] : memref<1x128x128xbf16, #tpu.memory_space<vmem>>, vector<1x128x128xbf16>
      %31 = vector.shape_cast %30 : vector<1x128x128xbf16> to vector<128x128xbf16>
      %cst_20 = arith.constant dense<0.000000e+00> : vector<128x128xf32>
      %32 = tpu.matmul %29, %31, %cst_20 {dimension_numbers = #tpu.dot_dimension_numbers<[1], [0], [0], [1], [0, 0, 1, 1], [], []>} : vector<128x128xbf16>, vector<128x128xbf16>, vector<128x128xf32> -> vector<128x128xf32>
      %33 = arith.truncf %32 : vector<128x128xf32> to vector<128x128xbf16>
      %c0_21 = arith.constant 0 : index
      %c0_22 = arith.constant 0 : index
      %34 = vector.load %arg11[%c0_21, %c0_22] : memref<128x128xbf16, #tpu.memory_space<vmem>>, vector<128x128xbf16>
      tpu.vector_store %arg11[%c0_21, %c0_22], %33 {strides = array<i32>} : memref<128x128xbf16, #tpu.memory_space<vmem>>, vector<128x128xbf16>,
    } else {
    }
    %c0 = arith.constant 0 : index
    %c0_4 = arith.constant 0 : index
    %8 = vector.load %arg2[%c0, %c0_4] : memref<128x128xbf16, #tpu.memory_space<vmem>>, vector<128x128xbf16>
    %c0_5 = arith.constant 0 : index
    %c0_6 = arith.constant 0 : index
    %9 = vector.load %arg11[%c0_5, %c0_6] : memref<128x128xbf16, #tpu.memory_space<vmem>>, vector<128x128xbf16>
    %cst = arith.constant dense<0.000000e+00> : vector<128x128xf32>
    %10 = tpu.matmul %8, %9, %cst {dimension_numbers = #tpu.dot_dimension_numbers<[1], [0], [0], [1], [0, 0, 1, 1], [], []>} : vector<128x128xbf16>, vector<128x128xbf16>, vector<128x128xf32> -> vector<128x128xf32>
    %c0_7 = arith.constant 0 : index
    %c0_8 = arith.constant 0 : index
    %c0_9 = arith.constant 0 : index
    %11 = vector.load %arg5[%c0_7, %c0_8, %c0_9] : memref<1x1x128xf32, #tpu.memory_space<vmem>>, vector<1x1x128xf32>
    %12 = vector.shape_cast %11 : vector<1x1x128xf32> to vector<1x128xf32>
    %13 = vector.broadcast %12 : vector<1x128xf32> to vector<128x128xf32>
    %14 = arith.addf %10, %13 : vector<128x128xf32>
    %c2_i32 = arith.constant 2 : i32
    %15 = arith.cmpi slt, %arg0, %c2_i32 : i32
    %cst_10 = arith.constant 0.000000e+00 : f32
    %16 = vector.broadcast %cst_10 : f32 to vector<128x128xf32>
    %17 = arith.maximumf %14, %16 : vector<128x128xf32>
    %18 = arith.select %15, %17, %14 : vector<128x128xf32>
    %c128_i32 = arith.constant 128 : i32
    %19 = arith.muli %arg1, %c128_i32 : i32
    %20 = tpu.assume_multiple %19, 128 : i32
    %21 = arith.truncf %18 : vector<128x128xf32> to vector<128x128xbf16>
    %22 = arith.index_cast %20 : i32 to index
    %c0_11 = arith.constant 0 : index
    %23 = vector.load %arg10[%22, %c0_11] : memref<128x128xbf16, #tpu.memory_space<vmem>>, vector<128x128xbf16>
    tpu.vector_store %arg10[%22, %c0_11], %21 {strides = array<i32>} : memref<128x128xbf16, #tpu.memory_space<vmem>>, vector<128x128xbf16>,
    %c2_i32_12 = arith.constant 2 : i32
    %24 = arith.cmpi eq, %arg0, %c2_i32_12 : i32
    %c0_i32_13 = arith.constant 0 : i32
    %25 = arith.cmpi eq, %arg1, %c0_i32_13 : i32
    %26 = arith.andi %24, %25 : i1
    %27 = arith.extui %26 : i1 to i32
    %c0_i32_14 = arith.constant 0 : i32
    %28 = arith.cmpi ne, %27, %c0_i32_14 : i32
    scf.if %28 {
      %c0_15 = arith.constant 0 : index
      %c0_16 = arith.constant 0 : index
      %29 = vector.load %arg6[%c0_15, %c0_16] : memref<8x128xbf16, #tpu.memory_space<vmem>>, vector<8x128xbf16>
      %c0_17 = arith.constant 0 : index
      %c0_18 = arith.constant 0 : index
      %30 = vector.load %arg10[%c0_17, %c0_18] : memref<128x128xbf16, #tpu.memory_space<vmem>>, vector<128x128xbf16>
      %cst_19 = arith.constant dense<0.000000e+00> : vector<8x128xf32>
      %31 = tpu.matmul %29, %30, %cst_19 {dimension_numbers = #tpu.dot_dimension_numbers<[1], [0], [0], [1], [0, 0, 1, 1], [], []>} : vector<8x128xbf16>, vector<128x128xbf16>, vector<8x128xf32> -> vector<8x128xf32>
      %32 = arith.truncf %31 : vector<8x128xf32> to vector<8x128xbf16>
      %c0_20 = arith.constant 0 : index
      %c0_21 = arith.constant 0 : index
      %33 = vector.load %arg7[%c0_20, %c0_21] : memref<128x128xbf16, #tpu.memory_space<vmem>>, vector<128x128xbf16>
      %cst_22 = arith.constant dense<0.000000e+00> : vector<8x128xf32>
      %34 = tpu.matmul %32, %33, %cst_22 {dimension_numbers = #tpu.dot_dimension_numbers<[1], [0], [0], [1], [0, 0, 1, 1], [], []>} : vector<8x128xbf16>, vector<128x128xbf16>, vector<8x128xf32> -> vector<8x128xf32>
      %c0_23 = arith.constant 0 : index
      %c0_24 = arith.constant 0 : index
      %35 = vector.load %arg8[%c0_23, %c0_24] : memref<1x128xf32, #tpu.memory_space<vmem>>, vector<1x128xf32>
      %36 = vector.broadcast %35 : vector<1x128xf32> to vector<8x128xf32>
      %37 = arith.addf %34, %36 : vector<8x128xf32>
      %c0_25 = arith.constant 0 : index
      %c0_26 = arith.constant 0 : index
      %38 = vector.load %arg9[%c0_25, %c0_26] : memref<8x128xf32, #tpu.memory_space<vmem>>, vector<8x128xf32>
      tpu.vector_store %arg9[%c0_25, %c0_26], %37 {strides = array<i32>} : memref<8x128xf32, #tpu.memory_space<vmem>>, vector<8x128xf32>,
    } else {
    }
    return
  }
  func.func @transform_0(%arg0: i32, %arg1: i32) -> (i32, i32) {
    %c0_i32 = arith.constant 0 : i32
    %c0_i32_0 = arith.constant 0 : i32
    return %arg1, %c0_i32 : i32, i32
  }
  func.func @transform_1(%arg0: i32, %arg1: i32) -> (i32, i32) {
    %c0_i32 = arith.constant 0 : i32
    %c0_i32_0 = arith.constant 0 : i32
    %c0_i32_1 = arith.constant 0 : i32
    return %c0_i32, %c0_i32_0 : i32, i32
  }
  func.func @transform_2(%arg0: i32, %arg1: i32) -> (i32, i32, i32) {
    %c0_i32 = arith.constant 0 : i32
    %c0_i32_0 = arith.constant 0 : i32
    %c0_i32_1 = arith.constant 0 : i32
    return %arg0, %c0_i32, %c0_i32_0 : i32, i32, i32
  }
  func.func @transform_3(%arg0: i32, %arg1: i32) -> (i32, i32, i32) {
    %c0_i32 = arith.constant 0 : i32
    %c0_i32_0 = arith.constant 0 : i32
    %c0_i32_1 = arith.constant 0 : i32
    return %arg0, %c0_i32, %c0_i32_0 : i32, i32, i32
  }
  func.func @transform_4(%arg0: i32, %arg1: i32) -> (i32, i32) {
    %c0_i32 = arith.constant 0 : i32
    %c0_i32_0 = arith.constant 0 : i32
    %c0_i32_1 = arith.constant 0 : i32
    return %c0_i32, %c0_i32_0 : i32, i32
  }
  func.func @transform_5(%arg0: i32, %arg1: i32) -> (i32, i32) {
    %c0_i32 = arith.constant 0 : i32
    %c0_i32_0 = arith.constant 0 : i32
    %c0_i32_1 = arith.constant 0 : i32
    return %c0_i32, %c0_i32_0 : i32, i32
  }
  func.func @transform_6(%arg0: i32, %arg1: i32) -> (i32, i32) {
    %c0_i32 = arith.constant 0 : i32
    %c0_i32_0 = arith.constant 0 : i32
    %c0_i32_1 = arith.constant 0 : i32
    return %c0_i32, %c0_i32_0 : i32, i32
  }
  func.func @transform_7(%arg0: i32, %arg1: i32) -> (i32, i32) {
    %c0_i32 = arith.constant 0 : i32
    %c0_i32_0 = arith.constant 0 : i32
    %c0_i32_1 = arith.constant 0 : i32
    return %c0_i32, %c0_i32_0 : i32, i32
  }
}

</mosaic_0001>

<llo_original>
// kernel: tpu_custom_call.1
$region0: #{tpu_custom_call.1}
  #allocation0 [shape = 'u32[]', space=smem, size = 0x4, offset = 0x4, fixed_abs, tag = 'smem constant byte address 0x4 - core index']
  #allocation1 [shape = 'u32[144,128]{1,0:T(1,128)}', space=vmem, size = 0x12000, scoped, tag = 'internal scratch']
  #allocation2 [shape = 'bf16[128,128]{1,0:T(8,128)(2,1)}', space=vmem, size = 0x8000, scoped, tag = 'scratch operand']
  #allocation3 [shape = 'bf16[128,128]{1,0:T(8,128)(2,1)}', space=vmem, size = 0x8000, scoped, tag = 'scratch operand']
  %s0 = inlined_call_operand.hbm [shape: bf16[128,128], index: 0, kind: input, shape index: {}]
  %s1 = inlined_call_operand.hbm [shape: bf16[128,128], index: 1, kind: input, shape index: {}]
  %s2 = inlined_call_operand.hbm [shape: bf16[3,128,128], index: 2, kind: input, shape index: {}]
  %s3 = inlined_call_operand.vmem [shape: f32[3,1,128], index: 3, kind: input, shape index: {}]
  %s4 = inlined_call_operand.vmem [shape: bf16[8,128], index: 4, kind: input, shape index: {}]
  %s5 = inlined_call_operand.hbm [shape: bf16[128,128], index: 5, kind: input, shape index: {}]
  %s6 = inlined_call_operand.vmem [shape: f32[1,128], index: 6, kind: input, shape index: {}]
  %s7 = inlined_call_operand.hbm [shape: f32[8,128], index: 7, kind: output, shape index: {}]
  %s8 = sld [smem:[#allocation0]]
  $region89: #{tpu_custom_call.1} parent=0
    _
  %s10 = ssub.s32 1, %s8
  %s11 = scalar_select 0, %s10, %s8
  $region1: #{tpu_custom_call.1} parent=0
    #allocation4 [shape = 'u8[32768]{0}', space=vmem, size = 0x8000, scoped, tag = 'input window, operand 0, single buffered']
    #allocation5 [shape = 's32[2]{0}', space=sflag, size = 0x8, scoped, tag = 'scoped memory for tpu_custom_call.1']
    #allocation6 [shape = 's32[2]{0}', space=sflag, size = 0x8, scoped, tag = 'scoped memory for tpu_custom_call.1']
    #allocation7 [shape = 'u8[32768]{0}', space=vmem, size = 0x8000, scoped, tag = 'input window, operand 1, single buffered']
    #allocation8 [shape = 's32[1]{0}', space=sflag, size = 0x4, scoped, tag = 'scoped memory for tpu_custom_call.1']
    #allocation9 [shape = 'u8[65536]{0}', space=vmem, size = 0x10000, scoped, tag = 'input window, operand 2']
    #allocation10 [shape = 'u8[32768]{0}', space=vmem, size = 0x8000, scoped, tag = 'input window, operand 5, single buffered']
    #allocation11 [shape = 'u8[4096]{0}', space=vmem, size = 0x1000, scoped, tag = 'output window, operand 0, single buffered']
    %12 = vsyncpa [#allocation5], 0
    %13 = vsyncpa [#allocation8], 0
    %14 = vsyncpa [#allocation6], 0
    loop: start=0, step=1, limit=5
    $region2: #{tpu_custom_call.1} parent=1 // loop_pre_header
      _
    $region3: #{tpu_custom_call.1} parent=1 // loop_header
      %s16 = sphi 0, %s20
      %p17 = scmp.ge.s32.totalorder %s16, 5
      %s23 = sphi 0, %s35
      %s24 = sphi 0, %s31
      %s25 = sphi 0, %s23
      %s26 = sphi 0, %s24
      %s27 = sphi 0, %s25
      %s28 = sphi 0, %s26
      %s38 = sphi 0, %s40
      %s41 = sphi 0, %s38
      %s42 = sphi 0, %s41
      %s58 = sphi 0, %s42
      %s62 = sphi 0, %s62
      %s64 = sphi 0, %s62
      %s65 = sphi 0, %s64
      %s79 = sphi 0, %s65
      %s85 = sphi 0, %s87
      %s88 = sphi 0, %s85
      %s89 = sphi 0, %s88
      %s105 = sphi 0, %s89
      %s111 = sphi 0, %s113
      %s114 = sphi 0, %s111
      %s115 = sphi 0, %s114
      %s131 = sphi 0, %s115
      %s135 = sphi 0, %s135
      %s137 = sphi 0, %s135
      %s138 = sphi 0, %s137
      %s152 = sphi 0, %s138
      %s156 = sphi 0, %s156
      %s158 = sphi 0, %s156
      %s159 = sphi 0, %s158
      %s173 = sphi 0, %s159
      %s177 = sphi 0, %s177
      %s179 = sphi 0, %s177
      %s180 = sphi 0, %s179
      %s194 = sphi 0, %s180
      %s198 = sphi 0, %s198
      %s200 = sphi 0, %s198
      %s201 = sphi 0, %s200
      %s215 = sphi 0, %s201
    $region4: #{tpu_custom_call.1} parent=1 // loop_header_branch
      %19 = sbr.rel (%p17) target = $region8
    $region5: #{tpu_custom_call.1} parent=1 // loop_body
      %s21 = ssub.s32 %s16, 1
      %s22 = ssub.s32 %s16, 2
      %s29 = sadd.s32 1, %s24
      %p30 = scmp.ge.s32.totalorder %s29, 1
      %s31 = scalar_select %p30, 0, %s29
      %s32 = sadd.s32 1, %s23
      %s33 = scalar_select %p30, %s32, %s23
      %p34 = scmp.ge.s32.totalorder %s33, 3
      %s35 = scalar_select %p34, 0, %s33
      %s36 = ssub.s32 %s24, %s31
      %p37 = scmp.eq.s32.totalorder %s36, 0
      %s39 = sadd.s32 %s38, 1
      %s40 = scalar_select %p37, %s38, %s39
      %p43 = pneg %p37
      %p44 = scmp.eq.s32.totalorder %s16, 2
      %p45 = por %p43, %p44
      %p46 = scmp.ne.s32.totalorder %s38, %s41
      %p47 = scmp.eq.s32.totalorder %s16, 0
      %p48 = por %p46, %p47
      %p49 = scmp.ne.s32.totalorder %s38, %s41
      %p50 = scmp.eq.s32.totalorder %s21, 2
      %p51 = por %p49, %p50
      %p52 = scmp.ne.s32.totalorder %s41, %s42
      %p53 = scmp.eq.s32.totalorder %s21, 0
      %p54 = por %p52, %p53
      %p55 = scmp.ne.s32.totalorder %s41, %s42
      %p56 = scmp.eq.s32.totalorder %s22, 2
      %p57 = por %p55, %p56
      %p59 = scmp.ne.s32.totalorder %s42, %s58
      %p60 = scmp.eq.s32.totalorder %s22, 0
      %p61 = por %p59, %p60
      %s63 = sadd.s32 %s62, 1
      %p66 = scmp.eq.s32.totalorder %s16, 2
      %p67 = scmp.ne.s32.totalorder %s62, %s64
      %p68 = scmp.eq.s32.totalorder %s16, 0
      %p69 = por %p67, %p68
      %p70 = scmp.ne.s32.totalorder %s62, %s64
      %p71 = scmp.eq.s32.totalorder %s21, 2
      %p72 = por %p70, %p71
      %p73 = scmp.ne.s32.totalorder %s64, %s65
      %p74 = scmp.eq.s32.totalorder %s21, 0
      %p75 = por %p73, %p74
      %p76 = scmp.ne.s32.totalorder %s64, %s65
      %p77 = scmp.eq.s32.totalorder %s22, 2
      %p78 = por %p76, %p77
      %p80 = scmp.ne.s32.totalorder %s65, %s79
      %p81 = scmp.eq.s32.totalorder %s22, 0
      %p82 = por %p80, %p81
      %s83 = ssub.s32 %s23, %s35
      %p84 = scmp.eq.s32.totalorder %s83, 0
      %s86 = sadd.s32 %s85, 1
      %s87 = scalar_select %p84, %s85, %s86
      %p90 = pneg %p84
      %p91 = scmp.eq.s32.totalorder %s16, 2
      %p92 = por %p90, %p91
      %p93 = scmp.ne.s32.totalorder %s85, %s88
      %p94 = scmp.eq.s32.totalorder %s16, 0
      %p95 = por %p93, %p94
      %p96 = scmp.ne.s32.totalorder %s85, %s88
      %p97 = scmp.eq.s32.totalorder %s21, 2
      %p98 = por %p96, %p97
      %p99 = scmp.ne.s32.totalorder %s88, %s89
      %p100 = scmp.eq.s32.totalorder %s21, 0
      %p101 = por %p99, %p100
      %p102 = scmp.ne.s32.totalorder %s88, %s89
      %p103 = scmp.eq.s32.totalorder %s22, 2
      %p104 = por %p102, %p103
      %p106 = scmp.ne.s32.totalorder %s89, %s105
      %p107 = scmp.eq.s32.totalorder %s22, 0
      %p108 = por %p106, %p107
      %s109 = ssub.s32 %s23, %s35
      %p110 = scmp.eq.s32.totalorder %s109, 0
      %s112 = sadd.s32 %s111, 1
      %s113 = scalar_select %p110, %s111, %s112
      %p116 = pneg %p110
      %p117 = scmp.eq.s32.totalorder %s16, 2
      %p118 = por %p116, %p117
      %p119 = scmp.ne.s32.totalorder %s111, %s114
      %p120 = scmp.eq.s32.totalorder %s16, 0
      %p121 = por %p119, %p120
      %p122 = scmp.ne.s32.totalorder %s111, %s114
      %p123 = scmp.eq.s32.totalorder %s21, 2
      %p124 = por %p122, %p123
      %p125 = scmp.ne.s32.totalorder %s114, %s115
      %p126 = scmp.eq.s32.totalorder %s21, 0
      %p127 = por %p125, %p126
      %p128 = scmp.ne.s32.totalorder %s114, %s115
      %p129 = scmp.eq.s32.totalorder %s22, 2
      %p130 = por %p128, %p129
      %p132 = scmp.ne.s32.totalorder %s115, %s131
      %p133 = scmp.eq.s32.totalorder %s22, 0
      %p134 = por %p132, %p133
      %s136 = sadd.s32 %s135, 1
      %p139 = scmp.eq.s32.totalorder %s16, 2
      %p140 = scmp.ne.s32.totalorder %s135, %s137
      %p141 = scmp.eq.s32.totalorder %s16, 0
      %p142 = por %p140, %p141
      %p143 = scmp.ne.s32.totalorder %s135, %s137
      %p144 = scmp.eq.s32.totalorder %s21, 2
      %p145 = por %p143, %p144
      %p146 = scmp.ne.s32.totalorder %s137, %s138
      %p147 = scmp.eq.s32.totalorder %s21, 0
      %p148 = por %p146, %p147
      %p149 = scmp.ne.s32.totalorder %s137, %s138
      %p150 = scmp.eq.s32.totalorder %s22, 2
      %p151 = por %p149, %p150
      %p153 = scmp.ne.s32.totalorder %s138, %s152
      %p154 = scmp.eq.s32.totalorder %s22, 0
      %p155 = por %p153, %p154
      %s157 = sadd.s32 %s156, 1
      %p160 = scmp.eq.s32.totalorder %s16, 2
      %p161 = scmp.ne.s32.totalorder %s156, %s158
      %p162 = scmp.eq.s32.totalorder %s16, 0
      %p163 = por %p161, %p162
      %p164 = scmp.ne.s32.totalorder %s156, %s158
      %p165 = scmp.eq.s32.totalorder %s21, 2
      %p166 = por %p164, %p165
      %p167 = scmp.ne.s32.totalorder %s158, %s159
      %p168 = scmp.eq.s32.totalorder %s21, 0
      %p169 = por %p167, %p168
      %p170 = scmp.ne.s32.totalorder %s158, %s159
      %p171 = scmp.eq.s32.totalorder %s22, 2
      %p172 = por %p170, %p171
      %p174 = scmp.ne.s32.totalorder %s159, %s173
      %p175 = scmp.eq.s32.totalorder %s22, 0
      %p176 = por %p174, %p175
      %s178 = sadd.s32 %s177, 1
      %p181 = scmp.eq.s32.totalorder %s16, 2
      %p182 = scmp.ne.s32.totalorder %s177, %s179
      %p183 = scmp.eq.s32.totalorder %s16, 0
      %p184 = por %p182, %p183
      %p185 = scmp.ne.s32.totalorder %s177, %s179
      %p186 = scmp.eq.s32.totalorder %s21, 2
      %p187 = por %p185, %p186
      %p188 = scmp.ne.s32.totalorder %s179, %s180
      %p189 = scmp.eq.s32.totalorder %s21, 0
      %p190 = por %p188, %p189
      %p191 = scmp.ne.s32.totalorder %s179, %s180
      %p192 = scmp.eq.s32.totalorder %s22, 2
      %p193 = por %p191, %p192
      %p195 = scmp.ne.s32.totalorder %s180, %s194
      %p196 = scmp.eq.s32.totalorder %s22, 0
      %p197 = por %p195, %p196
      %s199 = sadd.s32 %s198, 1
      %p202 = scmp.eq.s32.totalorder %s16, 2
      %p203 = scmp.ne.s32.totalorder %s198, %s200
      %p204 = scmp.eq.s32.totalorder %s16, 0
      %p205 = por %p203, %p204
      %p206 = scmp.ne.s32.totalorder %s198, %s200
      %p207 = scmp.eq.s32.totalorder %s21, 2
      %p208 = por %p206, %p207
      %p209 = scmp.ne.s32.totalorder %s200, %s201
      %p210 = scmp.eq.s32.totalorder %s21, 0
      %p211 = por %p209, %p210
      %p212 = scmp.ne.s32.totalorder %s200, %s201
      %p213 = scmp.eq.s32.totalorder %s22, 2
      %p214 = por %p212, %p213
      %p216 = scmp.ne.s32.totalorder %s201, %s215
      %p217 = scmp.eq.s32.totalorder %s22, 0
      %p218 = por %p216, %p217
      %p219 = scmp.le.s32.totalorder 1, %s16
      %p220 = scmp.lt.s32.totalorder %s16, 4
      %p221 = pnand %p219, %p220
      %p222 = pneg %p221
      // Predicated region
      $region9: #{tpu_custom_call.1} parent=5 // pred_check
        _
      $region10: #{tpu_custom_call.1} parent=5 // pred_check_branch
        %224 = sbr.rel (%p221) target = $region12
      $region11: #{tpu_custom_call.1} parent=5 // pred_region
        %s225 = ssub.s32 %s16, 1
        // Predicated region
        $region13: #{tpu_custom_call.1} parent=11 // pred_check
          %p226 = pneg %p54
        $region14: #{tpu_custom_call.1} parent=11 // pred_check_branch
          %228 = sbr.rel (%p226) target = $region16
        $region15: #{tpu_custom_call.1} parent=11 // pred_region
          %s229 = smul.u32 16, %s26
          %s231 = ssub.s32 1024, 1024
          %232 = vsyncadd [#allocation5], %s231
          %s233 = smul.addr %s229, 64
          %s234 = scalar_lea.hbm %s0, %s233
          %s235 = sshll.u32 [#allocation4], 4
          %s236 = int_to_ptr.vmem [resolvable:$true] %s235
          %241 = dma.hbm_to_vmem [thread:$0]  %s234, 1024, %s236, [#allocation5], 64, 64, 4
        $region16: #{tpu_custom_call.1} parent=11 // pred_fallthru
          _
        // Predicated region
        $region17: #{tpu_custom_call.1} parent=11 // pred_check
          %p242 = pneg %p75
        $region18: #{tpu_custom_call.1} parent=11 // pred_check_branch
          %244 = sbr.rel (%p242) target = $region20
        $region19: #{tpu_custom_call.1} parent=11 // pred_region
          %s246 = ssub.s32 1024, 1024
          %247 = vsyncadd [#allocation8], %s246
          %s248 = sshll.u32 [#allocation7], 4
          %s249 = int_to_ptr.vmem [resolvable:$true] %s248
          %254 = dma.hbm_to_vmem [thread:$0]  %s1, 1024, %s249, [#allocation8], 64, 64, 4
        $region20: #{tpu_custom_call.1} parent=11 // pred_fallthru
          _
        // Predicated region
        $region21: #{tpu_custom_call.1} parent=11 // pred_check
          %p255 = pneg %p148
        $region22: #{tpu_custom_call.1} parent=11 // pred_check_branch
          %257 = sbr.rel (%p255) target = $region24
        $region23: #{tpu_custom_call.1} parent=11 // pred_region
          _
        $region24: #{tpu_custom_call.1} parent=11 // pred_fallthru
          _
        // Predicated region
        $region25: #{tpu_custom_call.1} parent=11 // pred_check
          %p258 = pneg %p169
        $region26: #{tpu_custom_call.1} parent=11 // pred_check_branch
          %260 = sbr.rel (%p258) target = $region28
        $region27: #{tpu_custom_call.1} parent=11 // pred_region
          %s262 = ssub.s32 1024, 1024
          %263 = vsyncadd [#allocation8], %s262
          %s264 = sshll.u32 [#allocation10], 4
          %s265 = int_to_ptr.vmem [resolvable:$true] %s264
          %270 = dma.hbm_to_vmem [thread:$0]  %s5, 1024, %s265, [#allocation8], 64, 64, 4
        $region28: #{tpu_custom_call.1} parent=11 // pred_fallthru
          _
        // Predicated region
        $region29: #{tpu_custom_call.1} parent=11 // pred_check
          %p271 = pneg %p190
        $region30: #{tpu_custom_call.1} parent=11 // pred_check_branch
          %273 = sbr.rel (%p271) target = $region32
        $region31: #{tpu_custom_call.1} parent=11 // pred_region
          _
        $region32: #{tpu_custom_call.1} parent=11 // pred_fallthru
          _
      $region12: #{tpu_custom_call.1} parent=5 // pred_fallthru
        _
      %p274 = scmp.lt.s32.totalorder %s16, 3
      // Predicated region
      $region33: #{tpu_custom_call.1} parent=5 // pred_check
        %p275 = pneg %p274
      $region34: #{tpu_custom_call.1} parent=5 // pred_check_branch
        %277 = sbr.rel (%p275) target = $region36
      $region35: #{tpu_custom_call.1} parent=5 // pred_region
        // Predicated region
        $region37: #{tpu_custom_call.1} parent=35 // pred_check
          %p278 = pneg %p95
        $region38: #{tpu_custom_call.1} parent=35 // pred_check_branch
          %280 = sbr.rel (%p278) target = $region40
        $region39: #{tpu_custom_call.1} parent=35 // pred_region
          %s281 = sand.u32 %s16, 1
          %s282 = scalar_lea.sflag [#allocation5], %s281
          %s283 = sand.u32 %s85, 1
          %s284 = smul.addr %s283, 64
          %s285 = scalar_lea.vmem [#allocation9], %s284
          %s287 = ssub.s32 1024, 1024
          %288 = vsyncadd %s282, %s287
          %s289 = smul.addr %s23, 16
          %s290 = smul.addr %s289, 64
          %s291 = scalar_lea.hbm %s2, %s290
          %s292 = sshll.u32 %s285, 4
          %s293 = int_to_ptr.vmem [resolvable:$true] %s292
          %298 = dma.hbm_to_vmem [thread:$0]  %s291, 1024, %s293, %s282, 64, 64, 4
        $region40: #{tpu_custom_call.1} parent=35 // pred_fallthru
          _
        // Predicated region
        $region41: #{tpu_custom_call.1} parent=35 // pred_check
          %p299 = pneg %p121
        $region42: #{tpu_custom_call.1} parent=35 // pred_check_branch
          %301 = sbr.rel (%p299) target = $region44
        $region43: #{tpu_custom_call.1} parent=35 // pred_region
          %p302 = scmp.lt.s32.totalorder %s23, 2
          %s303 = scalar_select %p302, %s23, 2
          %s304 = scalar_lea.vmem %s3, %s303
        $region44: #{tpu_custom_call.1} parent=35 // pred_fallthru
          _
      $region36: #{tpu_custom_call.1} parent=5 // pred_fallthru
        _
      %p305 = scmp.le.s32.totalorder 1, %s16
      %p306 = scmp.lt.s32.totalorder %s16, 4
      %p307 = pnand %p305, %p306
      %p308 = pneg %p307
      // Predicated region
      $region45: #{tpu_custom_call.1} parent=5 // pred_check
        _
      $region46: #{tpu_custom_call.1} parent=5 // pred_check_branch
        %310 = sbr.rel (%p307) target = $region48
      $region47: #{tpu_custom_call.1} parent=5 // pred_region
        %s311 = ssub.s32 %s16, 1
        // Predicated region
        $region49: #{tpu_custom_call.1} parent=47 // pred_check
          %p312 = pneg %p54
        $region50: #{tpu_custom_call.1} parent=47 // pred_check_branch
          %314 = sbr.rel (%p312) target = $region52
        $region51: #{tpu_custom_call.1} parent=47 // pred_region
          %315 = dma.done [#allocation5], 1024
        $region52: #{tpu_custom_call.1} parent=47 // pred_fallthru
          _
        // Predicated region
        $region53: #{tpu_custom_call.1} parent=47 // pred_check
          %p316 = pneg %p75
        $region54: #{tpu_custom_call.1} parent=47 // pred_check_branch
          %318 = sbr.rel (%p316) target = $region56
        $region55: #{tpu_custom_call.1} parent=47 // pred_region
          %319 = dma.done [#allocation8], 1024
        $region56: #{tpu_custom_call.1} parent=47 // pred_fallthru
          _
        %s320 = sand.u32 %s21, 1
        %s321 = scalar_lea.sflag [#allocation5], %s320
        %s322 = sand.u32 %s88, 1
        %s323 = smul.addr %s322, 64
        %s324 = scalar_lea.vmem [#allocation9], %s323
        // Predicated region
        $region57: #{tpu_custom_call.1} parent=47 // pred_check
          %p325 = pneg %p101
        $region58: #{tpu_custom_call.1} parent=47 // pred_check_branch
          %327 = sbr.rel (%p325) target = $region60
        $region59: #{tpu_custom_call.1} parent=47 // pred_region
          %328 = dma.done %s321, 1024
        $region60: #{tpu_custom_call.1} parent=47 // pred_fallthru
          _
        // Predicated region
        $region61: #{tpu_custom_call.1} parent=47 // pred_check
          %p329 = pneg %p169
        $region62: #{tpu_custom_call.1} parent=47 // pred_check_branch
          %331 = sbr.rel (%p329) target = $region64
        $region63: #{tpu_custom_call.1} parent=47 // pred_region
          %332 = dma.done [#allocation8], 1024
        $region64: #{tpu_custom_call.1} parent=47 // pred_fallthru
          _
        %p333 = pneg %p54
        %p334 = pneg %p51
        %p335 = pneg %p75
        %p336 = pneg %p72
        %s337 = sand.u32 %s21, 1
        %s338 = scalar_lea.sflag [#allocation5], %s337
        %s339 = sand.u32 %s88, 1
        %s340 = smul.addr %s339, 64
        %s341 = scalar_lea.vmem [#allocation9], %s340
        %p342 = pneg %p101
        %p343 = pneg %p98
        %p344 = scmp.lt.s32.totalorder %s25, 2
        %s345 = scalar_select %p344, %s25, 2
        %s346 = scalar_lea.vmem %s3, %s345
        %p347 = pneg %p127
        %p348 = pneg %p124
        %p349 = pneg %p148
        %p350 = pneg %p145
        %p351 = pneg %p169
        %p352 = pneg %p166
        %p353 = pneg %p190
        %p354 = pneg %p187
        %p355 = pneg %p211
        %p356 = pneg %p208
        %s357 = smul.u32 16, %s26
        %p358 = scmp.lt.s32.totalorder %s25, 2
        %s359 = scalar_select %p358, %s25, 2
        %s360 = scalar_lea.vmem %s3, %s359
        %p362 = scmp.eq.s32.totalorder %s25, 0
        %p363 = scmp.eq.s32.totalorder %s26, 0
        %p364 = pnand %p362, %p363
        %p365 = pneg %p364
        // Predicated region
        $region65: #{tpu_custom_call.1} parent=47 // pred_check
          _
        $region66: #{tpu_custom_call.1} parent=47 // pred_check_branch
          %367 = sbr.rel (%p364) target = $region68
        $region67: #{tpu_custom_call.1} parent=47 // pred_region
          %v368 = vld [vmem:[#allocation7] sm:$0xf]
          %v369 = vld [vmem:[#allocation7 + $0x4] sm:$0xf]
          %v370 = vld [vmem:[#allocation7 + $0x8] sm:$0xf]
          %v371 = vld [vmem:[#allocation7 + $0xc] sm:$0xf]
          %v372 = vld [vmem:[#allocation7 + $0x10] sm:$0xf]
          %v373 = vld [vmem:[#allocation7 + $0x14] sm:$0xf]
          %v374 = vld [vmem:[#allocation7 + $0x18] sm:$0xf]
          %v375 = vld [vmem:[#allocation7 + $0x1c] sm:$0xf]
          %v376 = vld [vmem:[#allocation7 + $0x20] sm:$0xf]
          %v377 = vld [vmem:[#allocation7 + $0x24] sm:$0xf]
          %v378 = vld [vmem:[#allocation7 + $0x28] sm:$0xf]
          %v379 = vld [vmem:[#allocation7 + $0x2c] sm:$0xf]
          %v380 = vld [vmem:[#allocation7 + $0x30] sm:$0xf]
          %v381 = vld [vmem:[#allocation7 + $0x34] sm:$0xf]
          %v382 = vld [vmem:[#allocation7 + $0x38] sm:$0xf]
          %v383 = vld [vmem:[#allocation7 + $0x3c] sm:$0xf]
          %384 = vst [vmem:[#allocation2] sm:$0xf] %v368
          %385 = vst [vmem:[#allocation2 + $0x4] sm:$0xf] %v369
          %386 = vst [vmem:[#allocation2 + $0x8] sm:$0xf] %v370
          %387 = vst [vmem:[#allocation2 + $0xc] sm:$0xf] %v371
          %388 = vst [vmem:[#allocation2 + $0x10] sm:$0xf] %v372
          %389 = vst [vmem:[#allocation2 + $0x14] sm:$0xf] %v373
          %390 = vst [vmem:[#allocation2 + $0x18] sm:$0xf] %v374
          %391 = vst [vmem:[#allocation2 + $0x1c] sm:$0xf] %v375
          %392 = vst [vmem:[#allocation2 + $0x20] sm:$0xf] %v376
          %393 = vst [vmem:[#allocation2 + $0x24] sm:$0xf] %v377
          %394 = vst [vmem:[#allocation2 + $0x28] sm:$0xf] %v378
          %395 = vst [vmem:[#allocation2 + $0x2c] sm:$0xf] %v379
          %396 = vst [vmem:[#allocation2 + $0x30] sm:$0xf] %v380
          %397 = vst [vmem:[#allocation2 + $0x34] sm:$0xf] %v381
          %398 = vst [vmem:[#allocation2 + $0x38] sm:$0xf] %v382
          %399 = vst [vmem:[#allocation2 + $0x3c] sm:$0xf] %v383
        $region68: #{tpu_custom_call.1} parent=47 // pred_fallthru
          _
        // Predicated region
        $region69: #{tpu_custom_call.1} parent=47 // pred_check
          %p400 = pneg %p363
        $region70: #{tpu_custom_call.1} parent=47 // pred_check_branch
          %402 = sbr.rel (%p400) target = $region72
        $region71: #{tpu_custom_call.1} parent=47 // pred_region
          %v403 = vld [vmem:[#allocation2] sm:$0xf]
          %v404 = vld [vmem:[#allocation2 + $0x4] sm:$0xf]
          %v405 = vld [vmem:[#allocation2 + $0x8] sm:$0xf]
          %v406 = vld [vmem:[#allocation2 + $0xc] sm:$0xf]
          %v407 = vld [vmem:[#allocation2 + $0x10] sm:$0xf]
          %v408 = vld [vmem:[#allocation2 + $0x14] sm:$0xf]
          %v409 = vld [vmem:[#allocation2 + $0x18] sm:$0xf]
          %v410 = vld [vmem:[#allocation2 + $0x1c] sm:$0xf]
          %v411 = vld [vmem:[#allocation2 + $0x20] sm:$0xf]
          %v412 = vld [vmem:[#allocation2 + $0x24] sm:$0xf]
          %v413 = vld [vmem:[#allocation2 + $0x28] sm:$0xf]
          %v414 = vld [vmem:[#allocation2 + $0x2c] sm:$0xf]
          %v415 = vld [vmem:[#allocation2 + $0x30] sm:$0xf]
          %v416 = vld [vmem:[#allocation2 + $0x34] sm:$0xf]
          %v417 = vld [vmem:[#allocation2 + $0x38] sm:$0xf]
          %v418 = vld [vmem:[#allocation2 + $0x3c] sm:$0xf]
          %v419 = vld [vmem:[%s324] sm:$0xf]
          %v420 = vld [vmem:[%s324 + $0x4] sm:$0xf]
          %v421 = vld [vmem:[%s324 + $0x8] sm:$0xf]
          %v422 = vld [vmem:[%s324 + $0xc] sm:$0xf]
          %v423 = vld [vmem:[%s324 + $0x10] sm:$0xf]
          %v424 = vld [vmem:[%s324 + $0x14] sm:$0xf]
          %v425 = vld [vmem:[%s324 + $0x18] sm:$0xf]
          %v426 = vld [vmem:[%s324 + $0x1c] sm:$0xf]
          %v427 = vld [vmem:[%s324 + $0x20] sm:$0xf]
          %v428 = vld [vmem:[%s324 + $0x24] sm:$0xf]
          %v429 = vld [vmem:[%s324 + $0x28] sm:$0xf]
          %v430 = vld [vmem:[%s324 + $0x2c] sm:$0xf]
          %v431 = vld [vmem:[%s324 + $0x30] sm:$0xf]
          %v432 = vld [vmem:[%s324 + $0x34] sm:$0xf]
          %v433 = vld [vmem:[%s324 + $0x38] sm:$0xf]
          %v434 = vld [vmem:[%s324 + $0x3c] sm:$0xf]
          %v451 = vunpack.c.l.b16 %v403
          %v452 = vunpack.c.l.b16 %v404
          %v453 = vunpack.c.l.b16 %v405
          %v454 = vunpack.c.l.b16 %v406
          %v455 = vunpack.c.l.b16 %v407
          %v456 = vunpack.c.l.b16 %v408
          %v457 = vunpack.c.l.b16 %v409
          %v458 = vunpack.c.l.b16 %v410
          %v459 = vunpack.c.l.b16 %v411
          %v460 = vunpack.c.l.b16 %v412
          %v461 = vunpack.c.l.b16 %v413
          %v462 = vunpack.c.l.b16 %v414
          %v463 = vunpack.c.l.b16 %v415
          %v464 = vunpack.c.l.b16 %v416
          %v465 = vunpack.c.l.b16 %v417
          %v466 = vunpack.c.l.b16 %v418
          %v467 = vpack.c.b16 %v452, %v451
          %v468 = vpack.c.b16 %v454, %v453
          %v469 = vpack.c.b16 %v456, %v455
          %v470 = vpack.c.b16 %v458, %v457
          %v471 = vpack.c.b16 %v460, %v459
          %v472 = vpack.c.b16 %v462, %v461
          %v473 = vpack.c.b16 %v464, %v463
          %v474 = vpack.c.b16 %v466, %v465
          %v499 = vunpack.c.l.b16 %v419
          %v500 = vunpack.c.l.b16 %v420
          %v501 = vunpack.c.l.b16 %v421
          %v502 = vunpack.c.l.b16 %v422
          %v503 = vunpack.c.l.b16 %v423
          %v504 = vunpack.c.l.b16 %v424
          %v505 = vunpack.c.l.b16 %v425
          %v506 = vunpack.c.l.b16 %v426
          %v507 = vunpack.c.l.b16 %v427
          %v508 = vunpack.c.l.b16 %v428
          %v509 = vunpack.c.l.b16 %v429
          %v510 = vunpack.c.l.b16 %v430
          %v511 = vunpack.c.l.b16 %v431
          %v512 = vunpack.c.l.b16 %v432
          %v513 = vunpack.c.l.b16 %v433
          %v514 = vunpack.c.l.b16 %v434
          %v515 = vpack.c.b16 %v500, %v499
          %v516 = vpack.c.b16 %v502, %v501
          %v517 = vpack.c.b16 %v504, %v503
          %v518 = vpack.c.b16 %v506, %v505
          %v519 = vpack.c.b16 %v508, %v507
          %v520 = vpack.c.b16 %v510, %v509
          %v521 = vpack.c.b16 %v512, %v511
          %v522 = vpack.c.b16 %v514, %v513
          %531 = vmatprep.subr.bf16.mxu0 0
          %532 = vmatpush1.bf16.msra.mxu0 %v522
          %533 = vmatprep.subr.bf16.mxu0 0
          %534 = vmatpush1.bf16.msra.mxu0 %v521
          %535 = vmatprep.subr.bf16.mxu0 0
          %536 = vmatpush1.bf16.msra.mxu0 %v520
          %537 = vmatprep.subr.bf16.mxu0 0
          %538 = vmatpush1.bf16.msra.mxu0 %v519
          %539 = vmatprep.subr.bf16.mxu0 0
          %540 = vmatpush1.bf16.msra.mxu0 %v518
          %541 = vmatprep.subr.bf16.mxu0 0
          %542 = vmatpush1.bf16.msra.mxu0 %v517
          %543 = vmatprep.subr.bf16.mxu0 0
          %544 = vmatpush1.bf16.msra.mxu0 %v516
          %545 = vmatprep.subr.bf16.mxu0 0
          %546 = vmatpush1.bf16.msra.mxu0 %v515
          %547 = vmatprep.subr.bf16.mxu0 0
          %548 = vmatpush2.bf16.msra.mxu0 0
          %549 = vmatprep.subr.bf16.mxu0 0
          %550 = vmatpush2.bf16.msra.mxu0 0
          %551 = vmatprep.subr.bf16.mxu0 0
          %552 = vmatpush2.bf16.msra.mxu0 0
          %553 = vmatprep.subr.bf16.mxu0 0
          %554 = vmatpush2.bf16.msra.mxu0 0
          %555 = vmatprep.subr.bf16.mxu0 0
          %556 = vmatpush2.bf16.msra.mxu0 0
          %557 = vmatprep.subr.bf16.mxu0 0
          %558 = vmatpush2.bf16.msra.mxu0 0
          %559 = vmatprep.subr.bf16.mxu0 0
          %560 = vmatpush2.bf16.msra.mxu0 0
          %561 = vmatprep.subr.bf16.mxu0 0
          %562 = vmatpush2.bf16.msra.mxu0 0
          %563 = vmatprep.mubr.bf16.mxu0 0
          %564 = vmatmul.mubr.bf16.gmra.mxu0 %v467
          %v565 = vpop.f32.mrf.mxu0
          %v566 = vadd.f32 0.0, %v565
          %v567 = vpop.f32.mrf.mxu0
          %v568 = vpop.f32.mrf.mxu0
          %v569 = vadd.f32 0.0, %v568
          %v570 = vpop.f32.mrf.mxu0
          %571 = vmatprep.mubr.bf16.mxu0 0
          %572 = vmatmul.mubr.bf16.gmra.mxu0 %v468
          %v573 = vpop.f32.mrf.mxu0
          %v574 = vadd.f32 0.0, %v573
          %v575 = vpop.f32.mrf.mxu0
          %v576 = vpop.f32.mrf.mxu0
          %v577 = vadd.f32 0.0, %v576
          %v578 = vpop.f32.mrf.mxu0
          %579 = vmatprep.mubr.bf16.mxu0 0
          %580 = vmatmul.mubr.bf16.gmra.mxu0 %v469
          %v581 = vpop.f32.mrf.mxu0
          %v582 = vadd.f32 0.0, %v581
          %v583 = vpop.f32.mrf.mxu0
          %v584 = vpop.f32.mrf.mxu0
          %v585 = vadd.f32 0.0, %v584
          %v586 = vpop.f32.mrf.mxu0
          %587 = vmatprep.mubr.bf16.mxu0 0
          %588 = vmatmul.mubr.bf16.gmra.mxu0 %v470
          %v589 = vpop.f32.mrf.mxu0
          %v590 = vadd.f32 0.0, %v589
          %v591 = vpop.f32.mrf.mxu0
          %v592 = vpop.f32.mrf.mxu0
          %v593 = vadd.f32 0.0, %v592
          %v594 = vpop.f32.mrf.mxu0
          %595 = vmatprep.mubr.bf16.mxu0 0
          %596 = vmatmul.mubr.bf16.gmra.mxu0 %v471
          %v597 = vpop.f32.mrf.mxu0
          %v598 = vadd.f32 0.0, %v597
          %v599 = vpop.f32.mrf.mxu0
          %v600 = vpop.f32.mrf.mxu0
          %v601 = vadd.f32 0.0, %v600
          %v602 = vpop.f32.mrf.mxu0
          %603 = vmatprep.mubr.bf16.mxu0 0
          %604 = vmatmul.mubr.bf16.gmra.mxu0 %v472
          %v605 = vpop.f32.mrf.mxu0
          %v606 = vadd.f32 0.0, %v605
          %v607 = vpop.f32.mrf.mxu0
          %v608 = vpop.f32.mrf.mxu0
          %v609 = vadd.f32 0.0, %v608
          %v610 = vpop.f32.mrf.mxu0
          %611 = vmatprep.mubr.bf16.mxu0 0
          %612 = vmatmul.mubr.bf16.gmra.mxu0 %v473
          %v613 = vpop.f32.mrf.mxu0
          %v614 = vadd.f32 0.0, %v613
          %v615 = vpop.f32.mrf.mxu0
          %v616 = vpop.f32.mrf.mxu0
          %v617 = vadd.f32 0.0, %v616
          %v618 = vpop.f32.mrf.mxu0
          %619 = vmatprep.mubr.bf16.mxu0 0
          %620 = vmatmul.mubr.bf16.gmra.mxu0 %v474
          %v621 = vpop.f32.mrf.mxu0
          %v622 = vadd.f32 0.0, %v621
          %v623 = vpop.f32.mrf.mxu0
          %v624 = vpop.f32.mrf.mxu0
          %v625 = vadd.f32 0.0, %v624
          %v626 = vpop.f32.mrf.mxu0
          %627 = vdwg.mxu0
          %v628 = vpack.c.bf16 %v569, %v566
          %v629 = vpack.c.bf16 %v577, %v574
          %v630 = vpack.c.bf16 %v585, %v582
          %v631 = vpack.c.bf16 %v593, %v590
          %v632 = vpack.c.bf16 %v601, %v598
          %v633 = vpack.c.bf16 %v609, %v606
          %v634 = vpack.c.bf16 %v617, %v614
          %v635 = vpack.c.bf16 %v625, %v622
          %v644 = vunpack.c.l.b16 %v628
          %v645 = vunpack.c.h.b16 %v628
          %v646 = vunpack.c.l.b16 %v629
          %v647 = vunpack.c.h.b16 %v629
          %v648 = vunpack.c.l.b16 %v630
          %v649 = vunpack.c.h.b16 %v630
          %v650 = vunpack.c.l.b16 %v631
          %v651 = vunpack.c.h.b16 %v631
          %v652 = vunpack.c.l.b16 %v632
          %v653 = vunpack.c.h.b16 %v632
          %v654 = vunpack.c.l.b16 %v633
          %v655 = vunpack.c.h.b16 %v633
          %v656 = vunpack.c.l.b16 %v634
          %v657 = vunpack.c.h.b16 %v634
          %v658 = vunpack.c.l.b16 %v635
          %v659 = vunpack.c.h.b16 %v635
          %v660 = vpack.c.b16 %v644, %v644
          %v661 = vpack.c.b16 %v645, %v645
          %v662 = vpack.c.b16 %v646, %v646
          %v663 = vpack.c.b16 %v647, %v647
          %v664 = vpack.c.b16 %v648, %v648
          %v665 = vpack.c.b16 %v649, %v649
          %v666 = vpack.c.b16 %v650, %v650
          %v667 = vpack.c.b16 %v651, %v651
          %v668 = vpack.c.b16 %v652, %v652
          %v669 = vpack.c.b16 %v653, %v653
          %v670 = vpack.c.b16 %v654, %v654
          %v671 = vpack.c.b16 %v655, %v655
          %v672 = vpack.c.b16 %v656, %v656
          %v673 = vpack.c.b16 %v657, %v657
          %v674 = vpack.c.b16 %v658, %v658
          %v675 = vpack.c.b16 %v659, %v659
          %692 = vst [vmem:[#allocation3] sm:$0xf] %v660
          %693 = vst [vmem:[#allocation3 + $0x4] sm:$0xf] %v661
          %694 = vst [vmem:[#allocation3 + $0x8] sm:$0xf] %v662
          %695 = vst [vmem:[#allocation3 + $0xc] sm:$0xf] %v663
          %696 = vst [vmem:[#allocation3 + $0x10] sm:$0xf] %v664
          %697 = vst [vmem:[#allocation3 + $0x14] sm:$0xf] %v665
          %698 = vst [vmem:[#allocation3 + $0x18] sm:$0xf] %v666
          %699 = vst [vmem:[#allocation3 + $0x1c] sm:$0xf] %v667
          %700 = vst [vmem:[#allocation3 + $0x20] sm:$0xf] %v668
          %701 = vst [vmem:[#allocation3 + $0x24] sm:$0xf] %v669
          %702 = vst [vmem:[#allocation3 + $0x28] sm:$0xf] %v670
          %703 = vst [vmem:[#allocation3 + $0x2c] sm:$0xf] %v671
          %704 = vst [vmem:[#allocation3 + $0x30] sm:$0xf] %v672
          %705 = vst [vmem:[#allocation3 + $0x34] sm:$0xf] %v673
          %706 = vst [vmem:[#allocation3 + $0x38] sm:$0xf] %v674
          %707 = vst [vmem:[#allocation3 + $0x3c] sm:$0xf] %v675
        $region72: #{tpu_custom_call.1} parent=47 // pred_fallthru
          _
        %v708 = vld [vmem:[#allocation4] sm:$0xf]
        %v709 = vld [vmem:[#allocation4 + $0x4] sm:$0xf]
        %v710 = vld [vmem:[#allocation4 + $0x8] sm:$0xf]
        %v711 = vld [vmem:[#allocation4 + $0xc] sm:$0xf]
        %v712 = vld [vmem:[#allocation4 + $0x10] sm:$0xf]
        %v713 = vld [vmem:[#allocation4 + $0x14] sm:$0xf]
        %v714 = vld [vmem:[#allocation4 + $0x18] sm:$0xf]
        %v715 = vld [vmem:[#allocation4 + $0x1c] sm:$0xf]
        %v716 = vld [vmem:[#allocation4 + $0x20] sm:$0xf]
        %v717 = vld [vmem:[#allocation4 + $0x24] sm:$0xf]
        %v718 = vld [vmem:[#allocation4 + $0x28] sm:$0xf]
        %v719 = vld [vmem:[#allocation4 + $0x2c] sm:$0xf]
        %v720 = vld [vmem:[#allocation4 + $0x30] sm:$0xf]
        %v721 = vld [vmem:[#allocation4 + $0x34] sm:$0xf]
        %v722 = vld [vmem:[#allocation4 + $0x38] sm:$0xf]
        %v723 = vld [vmem:[#allocation4 + $0x3c] sm:$0xf]
        %v724 = vld [vmem:[#allocation3] sm:$0xf]
        %v725 = vld [vmem:[#allocation3 + $0x4] sm:$0xf]
        %v726 = vld [vmem:[#allocation3 + $0x8] sm:$0xf]
        %v727 = vld [vmem:[#allocation3 + $0xc] sm:$0xf]
        %v728 = vld [vmem:[#allocation3 + $0x10] sm:$0xf]
        %v729 = vld [vmem:[#allocation3 + $0x14] sm:$0xf]
        %v730 = vld [vmem:[#allocation3 + $0x18] sm:$0xf]
        %v731 = vld [vmem:[#allocation3 + $0x1c] sm:$0xf]
        %v732 = vld [vmem:[#allocation3 + $0x20] sm:$0xf]
        %v733 = vld [vmem:[#allocation3 + $0x24] sm:$0xf]
        %v734 = vld [vmem:[#allocation3 + $0x28] sm:$0xf]
        %v735 = vld [vmem:[#allocation3 + $0x2c] sm:$0xf]
        %v736 = vld [vmem:[#allocation3 + $0x30] sm:$0xf]
        %v737 = vld [vmem:[#allocation3 + $0x34] sm:$0xf]
        %v738 = vld [vmem:[#allocation3 + $0x38] sm:$0xf]
        %v739 = vld [vmem:[#allocation3 + $0x3c] sm:$0xf]
        %v740 = vld [vmem:[%s360] sm:$0x1]
        %v742 = vlaneseq
        %v743 = vshrl.u32 %v742, 7
        %v744 = vsub.s32 0, %v743
        %v745 = vrot.slane %v740, %v744
        %v763 = vunpack.c.l.b16 %v708
        %v764 = vunpack.c.l.b16 %v709
        %v765 = vunpack.c.l.b16 %v710
        %v766 = vunpack.c.l.b16 %v711
        %v767 = vunpack.c.l.b16 %v712
        %v768 = vunpack.c.l.b16 %v713
        %v769 = vunpack.c.l.b16 %v714
        %v770 = vunpack.c.l.b16 %v715
        %v771 = vunpack.c.l.b16 %v716
        %v772 = vunpack.c.l.b16 %v717
        %v773 = vunpack.c.l.b16 %v718
        %v774 = vunpack.c.l.b16 %v719
        %v775 = vunpack.c.l.b16 %v720
        %v776 = vunpack.c.l.b16 %v721
        %v777 = vunpack.c.l.b16 %v722
        %v778 = vunpack.c.l.b16 %v723
        %v779 = vpack.c.b16 %v764, %v763
        %v780 = vpack.c.b16 %v766, %v765
        %v781 = vpack.c.b16 %v768, %v767
        %v782 = vpack.c.b16 %v770, %v769
        %v783 = vpack.c.b16 %v772, %v771
        %v784 = vpack.c.b16 %v774, %v773
        %v785 = vpack.c.b16 %v776, %v775
        %v786 = vpack.c.b16 %v778, %v777
        %v811 = vunpack.c.l.b16 %v724
        %v812 = vunpack.c.l.b16 %v725
        %v813 = vunpack.c.l.b16 %v726
        %v814 = vunpack.c.l.b16 %v727
        %v815 = vunpack.c.l.b16 %v728
        %v816 = vunpack.c.l.b16 %v729
        %v817 = vunpack.c.l.b16 %v730
        %v818 = vunpack.c.l.b16 %v731
        %v819 = vunpack.c.l.b16 %v732
        %v820 = vunpack.c.l.b16 %v733
        %v821 = vunpack.c.l.b16 %v734
        %v822 = vunpack.c.l.b16 %v735
        %v823 = vunpack.c.l.b16 %v736
        %v824 = vunpack.c.l.b16 %v737
        %v825 = vunpack.c.l.b16 %v738
        %v826 = vunpack.c.l.b16 %v739
        %v827 = vpack.c.b16 %v812, %v811
        %v828 = vpack.c.b16 %v814, %v813
        %v829 = vpack.c.b16 %v816, %v815
        %v830 = vpack.c.b16 %v818, %v817
        %v831 = vpack.c.b16 %v820, %v819
        %v832 = vpack.c.b16 %v822, %v821
        %v833 = vpack.c.b16 %v824, %v823
        %v834 = vpack.c.b16 %v826, %v825
        %843 = vmatprep.subr.bf16.mxu0 0
        %844 = vmatpush1.bf16.msra.mxu0 %v834
        %845 = vmatprep.subr.bf16.mxu0 0
        %846 = vmatpush1.bf16.msra.mxu0 %v833
        %847 = vmatprep.subr.bf16.mxu0 0
        %848 = vmatpush1.bf16.msra.mxu0 %v832
        %849 = vmatprep.subr.bf16.mxu0 0
        %850 = vmatpush1.bf16.msra.mxu0 %v831
        %851 = vmatprep.subr.bf16.mxu0 0
        %852 = vmatpush1.bf16.msra.mxu0 %v830
        %853 = vmatprep.subr.bf16.mxu0 0
        %854 = vmatpush1.bf16.msra.mxu0 %v829
        %855 = vmatprep.subr.bf16.mxu0 0
        %856 = vmatpush1.bf16.msra.mxu0 %v828
        %857 = vmatprep.subr.bf16.mxu0 0
        %858 = vmatpush1.bf16.msra.mxu0 %v827
        %859 = vmatprep.subr.bf16.mxu0 0
        %860 = vmatpush2.bf16.msra.mxu0 0
        %861 = vmatprep.subr.bf16.mxu0 0
        %862 = vmatpush2.bf16.msra.mxu0 0
        %863 = vmatprep.subr.bf16.mxu0 0
        %864 = vmatpush2.bf16.msra.mxu0 0
        %865 = vmatprep.subr.bf16.mxu0 0
        %866 = vmatpush2.bf16.msra.mxu0 0
        %867 = vmatprep.subr.bf16.mxu0 0
        %868 = vmatpush2.bf16.msra.mxu0 0
        %869 = vmatprep.subr.bf16.mxu0 0
        %870 = vmatpush2.bf16.msra.mxu0 0
        %871 = vmatprep.subr.bf16.mxu0 0
        %872 = vmatpush2.bf16.msra.mxu0 0
        %873 = vmatprep.subr.bf16.mxu0 0
        %874 = vmatpush2.bf16.msra.mxu0 0
        %875 = vmatprep.mubr.bf16.mxu0 0
        %876 = vmatmul.mubr.bf16.gmra.mxu0 %v779
        %v877 = vpop.f32.mrf.mxu0
        %v878 = vadd.f32 %v745, %v877
        %v879 = vpop.f32.mrf.mxu0
        %v880 = vpop.f32.mrf.mxu0
        %v881 = vadd.f32 %v745, %v880
        %v882 = vpop.f32.mrf.mxu0
        %883 = vmatprep.mubr.bf16.mxu0 0
        %884 = vmatmul.mubr.bf16.gmra.mxu0 %v780
        %v885 = vpop.f32.mrf.mxu0
        %v886 = vadd.f32 %v745, %v885
        %v887 = vpop.f32.mrf.mxu0
        %v888 = vpop.f32.mrf.mxu0
        %v889 = vadd.f32 %v745, %v888
        %v890 = vpop.f32.mrf.mxu0
        %891 = vmatprep.mubr.bf16.mxu0 0
        %892 = vmatmul.mubr.bf16.gmra.mxu0 %v781
        %v893 = vpop.f32.mrf.mxu0
        %v894 = vadd.f32 %v745, %v893
        %v895 = vpop.f32.mrf.mxu0
        %v896 = vpop.f32.mrf.mxu0
        %v897 = vadd.f32 %v745, %v896
        %v898 = vpop.f32.mrf.mxu0
        %899 = vmatprep.mubr.bf16.mxu0 0
        %900 = vmatmul.mubr.bf16.gmra.mxu0 %v782
        %v901 = vpop.f32.mrf.mxu0
        %v902 = vadd.f32 %v745, %v901
        %v903 = vpop.f32.mrf.mxu0
        %v904 = vpop.f32.mrf.mxu0
        %v905 = vadd.f32 %v745, %v904
        %v906 = vpop.f32.mrf.mxu0
        %907 = vmatprep.mubr.bf16.mxu0 0
        %908 = vmatmul.mubr.bf16.gmra.mxu0 %v783
        %v909 = vpop.f32.mrf.mxu0
        %v910 = vadd.f32 %v745, %v909
        %v911 = vpop.f32.mrf.mxu0
        %v912 = vpop.f32.mrf.mxu0
        %v913 = vadd.f32 %v745, %v912
        %v914 = vpop.f32.mrf.mxu0
        %915 = vmatprep.mubr.bf16.mxu0 0
        %916 = vmatmul.mubr.bf16.gmra.mxu0 %v784
        %v917 = vpop.f32.mrf.mxu0
        %v918 = vadd.f32 %v745, %v917
        %v919 = vpop.f32.mrf.mxu0
        %v920 = vpop.f32.mrf.mxu0
        %v921 = vadd.f32 %v745, %v920
        %v922 = vpop.f32.mrf.mxu0
        %923 = vmatprep.mubr.bf16.mxu0 0
        %924 = vmatmul.mubr.bf16.gmra.mxu0 %v785
        %v925 = vpop.f32.mrf.mxu0
        %v926 = vadd.f32 %v745, %v925
        %v927 = vpop.f32.mrf.mxu0
        %v928 = vpop.f32.mrf.mxu0
        %v929 = vadd.f32 %v745, %v928
        %v930 = vpop.f32.mrf.mxu0
        %931 = vmatprep.mubr.bf16.mxu0 0
        %932 = vmatmul.mubr.bf16.gmra.mxu0 %v786
        %v933 = vpop.f32.mrf.mxu0
        %v934 = vadd.f32 %v745, %v933
        %v935 = vpop.f32.mrf.mxu0
        %v936 = vpop.f32.mrf.mxu0
        %v937 = vadd.f32 %v745, %v936
        %v938 = vpop.f32.mrf.mxu0
        %939 = vdwg.mxu0
        %p940 = scmp.lt.s32.totalorder %s25, 2
        %v941 = vmax.f32 %v878, 0.0
        %v942 = vmax.f32 %v881, 0.0
        %v943 = vmax.f32 %v886, 0.0
        %v944 = vmax.f32 %v889, 0.0
        %v945 = vmax.f32 %v894, 0.0
        %v946 = vmax.f32 %v897, 0.0
        %v947 = vmax.f32 %v902, 0.0
        %v948 = vmax.f32 %v905, 0.0
        %v949 = vmax.f32 %v910, 0.0
        %v950 = vmax.f32 %v913, 0.0
        %v951 = vmax.f32 %v918, 0.0
        %v952 = vmax.f32 %v921, 0.0
        %v953 = vmax.f32 %v926, 0.0
        %v954 = vmax.f32 %v929, 0.0
        %v955 = vmax.f32 %v934, 0.0
        %v956 = vmax.f32 %v937, 0.0
        %s957 = scalar_select %p940, 1, 0
        %v958 = vstv %s957
        %vm959 = vcmp.eq.s32.totalorder %v958, 1
        %v960 = vsel %vm959, %v941, %v878
        %v961 = vsel %vm959, %v942, %v881
        %v962 = vsel %vm959, %v943, %v886
        %v963 = vsel %vm959, %v944, %v889
        %v964 = vsel %vm959, %v945, %v894
        %v965 = vsel %vm959, %v946, %v897
        %v966 = vsel %vm959, %v947, %v902
        %v967 = vsel %vm959, %v948, %v905
        %v968 = vsel %vm959, %v949, %v910
        %v969 = vsel %vm959, %v950, %v913
        %v970 = vsel %vm959, %v951, %v918
        %v971 = vsel %vm959, %v952, %v921
        %v972 = vsel %vm959, %v953, %v926
        %v973 = vsel %vm959, %v954, %v929
        %v974 = vsel %vm959, %v955, %v934
        %v975 = vsel %vm959, %v956, %v937
        %s976 = smul.u32 %s26, 128
        %v977 = vpack.c.bf16 %v961, %v960
        %v978 = vpack.c.bf16 %v963, %v962
        %v979 = vpack.c.bf16 %v965, %v964
        %v980 = vpack.c.bf16 %v967, %v966
        %v981 = vpack.c.bf16 %v969, %v968
        %v982 = vpack.c.bf16 %v971, %v970
        %v983 = vpack.c.bf16 %v973, %v972
        %v984 = vpack.c.bf16 %v975, %v974
        %v993 = vunpack.c.l.b16 %v977
        %v994 = vunpack.c.h.b16 %v977
        %v995 = vunpack.c.l.b16 %v978
        %v996 = vunpack.c.h.b16 %v978
        %v997 = vunpack.c.l.b16 %v979
        %v998 = vunpack.c.h.b16 %v979
        %v999 = vunpack.c.l.b16 %v980
        %v1000 = vunpack.c.h.b16 %v980
        %v1001 = vunpack.c.l.b16 %v981
        %v1002 = vunpack.c.h.b16 %v981
        %v1003 = vunpack.c.l.b16 %v982
        %v1004 = vunpack.c.h.b16 %v982
        %v1005 = vunpack.c.l.b16 %v983
        %v1006 = vunpack.c.h.b16 %v983
        %v1007 = vunpack.c.l.b16 %v984
        %v1008 = vunpack.c.h.b16 %v984
        %v1009 = vpack.c.b16 %v993, %v993
        %v1010 = vpack.c.b16 %v994, %v994
        %v1011 = vpack.c.b16 %v995, %v995
        %v1012 = vpack.c.b16 %v996, %v996
        %v1013 = vpack.c.b16 %v997, %v997
        %v1014 = vpack.c.b16 %v998, %v998
        %v1015 = vpack.c.b16 %v999, %v999
        %v1016 = vpack.c.b16 %v1000, %v1000
        %v1017 = vpack.c.b16 %v1001, %v1001
        %v1018 = vpack.c.b16 %v1002, %v1002
        %v1019 = vpack.c.b16 %v1003, %v1003
        %v1020 = vpack.c.b16 %v1004, %v1004
        %v1021 = vpack.c.b16 %v1005, %v1005
        %v1022 = vpack.c.b16 %v1006, %v1006
        %v1023 = vpack.c.b16 %v1007, %v1007
        %v1024 = vpack.c.b16 %v1008, %v1008
        %s1041 = sshra.s32 %s976, 3
        %s1042 = sand.u32 %s976, 7
        %s1043 = smul.addr %s1041, 4
        %s1044 = scalar_lea.vmem [#allocation2], %s1043
        %1045 = vst [vmem:[%s1044] sm:$0xf] %v1009
        %1046 = vst [vmem:[%s1044 + $0x4] sm:$0xf] %v1010
        %1047 = vst [vmem:[%s1044 + $0x8] sm:$0xf] %v1011
        %1048 = vst [vmem:[%s1044 + $0xc] sm:$0xf] %v1012
        %1049 = vst [vmem:[%s1044 + $0x10] sm:$0xf] %v1013
        %1050 = vst [vmem:[%s1044 + $0x14] sm:$0xf] %v1014
        %1051 = vst [vmem:[%s1044 + $0x18] sm:$0xf] %v1015
        %1052 = vst [vmem:[%s1044 + $0x1c] sm:$0xf] %v1016
        %1053 = vst [vmem:[%s1044 + $0x20] sm:$0xf] %v1017
        %1054 = vst [vmem:[%s1044 + $0x24] sm:$0xf] %v1018
        %1055 = vst [vmem:[%s1044 + $0x28] sm:$0xf] %v1019
        %1056 = vst [vmem:[%s1044 + $0x2c] sm:$0xf] %v1020
        %1057 = vst [vmem:[%s1044 + $0x30] sm:$0xf] %v1021
        %1058 = vst [vmem:[%s1044 + $0x34] sm:$0xf] %v1022
        %1059 = vst [vmem:[%s1044 + $0x38] sm:$0xf] %v1023
        %1060 = vst [vmem:[%s1044 + $0x3c] sm:$0xf] %v1024
        %p1061 = scmp.eq.s32.totalorder %s25, 2
        %p1062 = pnand %p1061, %p363
        %p1063 = pneg %p1062
        // Predicated region
        $region73: #{tpu_custom_call.1} parent=47 // pred_check
          _
        $region74: #{tpu_custom_call.1} parent=47 // pred_check_branch
          %1065 = sbr.rel (%p1062) target = $region76
        $region75: #{tpu_custom_call.1} parent=47 // pred_region
          %v1066 = vld [vmem:[%s4] sm:$0xf]
          %v1067 = vld [vmem:[#allocation2] sm:$0xf]
          %v1068 = vld [vmem:[#allocation2 + $0x4] sm:$0xf]
          %v1069 = vld [vmem:[#allocation2 + $0x8] sm:$0xf]
          %v1070 = vld [vmem:[#allocation2 + $0xc] sm:$0xf]
          %v1071 = vld [vmem:[#allocation2 + $0x10] sm:$0xf]
          %v1072 = vld [vmem:[#allocation2 + $0x14] sm:$0xf]
          %v1073 = vld [vmem:[#allocation2 + $0x18] sm:$0xf]
          %v1074 = vld [vmem:[#allocation2 + $0x1c] sm:$0xf]
          %v1075 = vld [vmem:[#allocation2 + $0x20] sm:$0xf]
          %v1076 = vld [vmem:[#allocation2 + $0x24] sm:$0xf]
          %v1077 = vld [vmem:[#allocation2 + $0x28] sm:$0xf]
          %v1078 = vld [vmem:[#allocation2 + $0x2c] sm:$0xf]
          %v1079 = vld [vmem:[#allocation2 + $0x30] sm:$0xf]
          %v1080 = vld [vmem:[#allocation2 + $0x34] sm:$0xf]
          %v1081 = vld [vmem:[#allocation2 + $0x38] sm:$0xf]
          %v1082 = vld [vmem:[#allocation2 + $0x3c] sm:$0xf]
          %v1099 = vunpack.c.l.b16 %v1067
          %v1100 = vunpack.c.l.b16 %v1068
          %v1101 = vunpack.c.l.b16 %v1069
          %v1102 = vunpack.c.l.b16 %v1070
          %v1103 = vunpack.c.l.b16 %v1071
          %v1104 = vunpack.c.l.b16 %v1072
          %v1105 = vunpack.c.l.b16 %v1073
          %v1106 = vunpack.c.l.b16 %v1074
          %v1107 = vunpack.c.l.b16 %v1075
          %v1108 = vunpack.c.l.b16 %v1076
          %v1109 = vunpack.c.l.b16 %v1077
          %v1110 = vunpack.c.l.b16 %v1078
          %v1111 = vunpack.c.l.b16 %v1079
          %v1112 = vunpack.c.l.b16 %v1080
          %v1113 = vunpack.c.l.b16 %v1081
          %v1114 = vunpack.c.l.b16 %v1082
          %v1115 = vpack.c.b16 %v1100, %v1099
          %v1116 = vpack.c.b16 %v1102, %v1101
          %v1117 = vpack.c.b16 %v1104, %v1103
          %v1118 = vpack.c.b16 %v1106, %v1105
          %v1119 = vpack.c.b16 %v1108, %v1107
          %v1120 = vpack.c.b16 %v1110, %v1109
          %v1121 = vpack.c.b16 %v1112, %v1111
          %v1122 = vpack.c.b16 %v1114, %v1113
          %1131 = vmatprep.subr.bf16.mxu0 0
          %1132 = vmatpush1.bf16.msra.mxu0 %v1122
          %1133 = vmatprep.subr.bf16.mxu0 0
          %1134 = vmatpush1.bf16.msra.mxu0 %v1121
          %1135 = vmatprep.subr.bf16.mxu0 0
          %1136 = vmatpush1.bf16.msra.mxu0 %v1120
          %1137 = vmatprep.subr.bf16.mxu0 0
          %1138 = vmatpush1.bf16.msra.mxu0 %v1119
          %1139 = vmatprep.subr.bf16.mxu0 0
          %1140 = vmatpush1.bf16.msra.mxu0 %v1118
          %1141 = vmatprep.subr.bf16.mxu0 0
          %1142 = vmatpush1.bf16.msra.mxu0 %v1117
          %1143 = vmatprep.subr.bf16.mxu0 0
          %1144 = vmatpush1.bf16.msra.mxu0 %v1116
          %1145 = vmatprep.subr.bf16.mxu0 0
          %1146 = vmatpush1.bf16.msra.mxu0 %v1115
          %1147 = vmatprep.subr.bf16.mxu0 0
          %1148 = vmatpush2.bf16.msra.mxu0 0
          %1149 = vmatprep.subr.bf16.mxu0 0
          %1150 = vmatpush2.bf16.msra.mxu0 0
          %1151 = vmatprep.subr.bf16.mxu0 0
          %1152 = vmatpush2.bf16.msra.mxu0 0
          %1153 = vmatprep.subr.bf16.mxu0 0
          %1154 = vmatpush2.bf16.msra.mxu0 0
          %1155 = vmatprep.subr.bf16.mxu0 0
          %1156 = vmatpush2.bf16.msra.mxu0 0
          %1157 = vmatprep.subr.bf16.mxu0 0
          %1158 = vmatpush2.bf16.msra.mxu0 0
          %1159 = vmatprep.subr.bf16.mxu0 0
          %1160 = vmatpush2.bf16.msra.mxu0 0
          %1161 = vmatprep.subr.bf16.mxu0 0
          %1162 = vmatpush2.bf16.msra.mxu0 0
          %1163 = vmatprep.mubr.bf16.mxu0 0
          %1164 = vmatmul.mubr.bf16.gmra.mxu0 %v1066
          %v1165 = vpop.f32.mrf.mxu0
          %v1166 = vadd.f32 0.0, %v1165
          %v1167 = vpop.f32.mrf.mxu0
          %v1168 = vpop.f32.mrf.mxu0
          %v1169 = vpop.f32.mrf.mxu0
          %1170 = vdwg.mxu0
          %v1171 = vpack.c.bf16 %v1166, %v1166
          %v1172 = vld [vmem:[#allocation10] sm:$0xf]
          %v1173 = vld [vmem:[#allocation10 + $0x4] sm:$0xf]
          %v1174 = vld [vmem:[#allocation10 + $0x8] sm:$0xf]
          %v1175 = vld [vmem:[#allocation10 + $0xc] sm:$0xf]
          %v1176 = vld [vmem:[#allocation10 + $0x10] sm:$0xf]
          %v1177 = vld [vmem:[#allocation10 + $0x14] sm:$0xf]
          %v1178 = vld [vmem:[#allocation10 + $0x18] sm:$0xf]
          %v1179 = vld [vmem:[#allocation10 + $0x1c] sm:$0xf]
          %v1180 = vld [vmem:[#allocation10 + $0x20] sm:$0xf]
          %v1181 = vld [vmem:[#allocation10 + $0x24] sm:$0xf]
          %v1182 = vld [vmem:[#allocation10 + $0x28] sm:$0xf]
          %v1183 = vld [vmem:[#allocation10 + $0x2c] sm:$0xf]
          %v1184 = vld [vmem:[#allocation10 + $0x30] sm:$0xf]
          %v1185 = vld [vmem:[#allocation10 + $0x34] sm:$0xf]
          %v1186 = vld [vmem:[#allocation10 + $0x38] sm:$0xf]
          %v1187 = vld [vmem:[#allocation10 + $0x3c] sm:$0xf]
          %v1188 = vld [vmem:[%s6] sm:$0x1]
          %v1190 = vlaneseq
          %v1191 = vshrl.u32 %v1190, 7
          %v1192 = vsub.s32 0, %v1191
          %v1193 = vrot.slane %v1188, %v1192
          %v1211 = vunpack.c.l.b16 %v1172
          %v1212 = vunpack.c.l.b16 %v1173
          %v1213 = vunpack.c.l.b16 %v1174
          %v1214 = vunpack.c.l.b16 %v1175
          %v1215 = vunpack.c.l.b16 %v1176
          %v1216 = vunpack.c.l.b16 %v1177
          %v1217 = vunpack.c.l.b16 %v1178
          %v1218 = vunpack.c.l.b16 %v1179
          %v1219 = vunpack.c.l.b16 %v1180
          %v1220 = vunpack.c.l.b16 %v1181
          %v1221 = vunpack.c.l.b16 %v1182
          %v1222 = vunpack.c.l.b16 %v1183
          %v1223 = vunpack.c.l.b16 %v1184
          %v1224 = vunpack.c.l.b16 %v1185
          %v1225 = vunpack.c.l.b16 %v1186
          %v1226 = vunpack.c.l.b16 %v1187
          %v1227 = vpack.c.b16 %v1212, %v1211
          %v1228 = vpack.c.b16 %v1214, %v1213
          %v1229 = vpack.c.b16 %v1216, %v1215
          %v1230 = vpack.c.b16 %v1218, %v1217
          %v1231 = vpack.c.b16 %v1220, %v1219
          %v1232 = vpack.c.b16 %v1222, %v1221
          %v1233 = vpack.c.b16 %v1224, %v1223
          %v1234 = vpack.c.b16 %v1226, %v1225
          %1243 = vmatprep.subr.bf16.mxu0 0
          %1244 = vmatpush1.bf16.msra.mxu0 %v1234
          %1245 = vmatprep.subr.bf16.mxu0 0
          %1246 = vmatpush1.bf16.msra.mxu0 %v1233
          %1247 = vmatprep.subr.bf16.mxu0 0
          %1248 = vmatpush1.bf16.msra.mxu0 %v1232
          %1249 = vmatprep.subr.bf16.mxu0 0
          %1250 = vmatpush1.bf16.msra.mxu0 %v1231
          %1251 = vmatprep.subr.bf16.mxu0 0
          %1252 = vmatpush1.bf16.msra.mxu0 %v1230
          %1253 = vmatprep.subr.bf16.mxu0 0
          %1254 = vmatpush1.bf16.msra.mxu0 %v1229
          %1255 = vmatprep.subr.bf16.mxu0 0
          %1256 = vmatpush1.bf16.msra.mxu0 %v1228
          %1257 = vmatprep.subr.bf16.mxu0 0
          %1258 = vmatpush1.bf16.msra.mxu0 %v1227
          %1259 = vmatprep.subr.bf16.mxu0 0
          %1260 = vmatpush2.bf16.msra.mxu0 0
          %1261 = vmatprep.subr.bf16.mxu0 0
          %1262 = vmatpush2.bf16.msra.mxu0 0
          %1263 = vmatprep.subr.bf16.mxu0 0
          %1264 = vmatpush2.bf16.msra.mxu0 0
          %1265 = vmatprep.subr.bf16.mxu0 0
          %1266 = vmatpush2.bf16.msra.mxu0 0
          %1267 = vmatprep.subr.bf16.mxu0 0
          %1268 = vmatpush2.bf16.msra.mxu0 0
          %1269 = vmatprep.subr.bf16.mxu0 0
          %1270 = vmatpush2.bf16.msra.mxu0 0
          %1271 = vmatprep.subr.bf16.mxu0 0
          %1272 = vmatpush2.bf16.msra.mxu0 0
          %1273 = vmatprep.subr.bf16.mxu0 0
          %1274 = vmatpush2.bf16.msra.mxu0 0
          %1275 = vmatprep.mubr.bf16.mxu0 0
          %1276 = vmatmul.mubr.bf16.gmra.mxu0 %v1171
          %v1277 = vpop.f32.mrf.mxu0
          %v1278 = vadd.f32 %v1193, %v1277
          %v1279 = vpop.f32.mrf.mxu0
          %v1280 = vpop.f32.mrf.mxu0
          %v1281 = vpop.f32.mrf.mxu0
          %1282 = vdwg.mxu0
          %1283 = vst [vmem:[#allocation11] sm:$0xff] %v1278
        $region76: #{tpu_custom_call.1} parent=47 // pred_fallthru
          _
        // Predicated region
        $region77: #{tpu_custom_call.1} parent=47 // pred_check
          %p1284 = pneg %p208
        $region78: #{tpu_custom_call.1} parent=47 // pred_check_branch
          %1286 = sbr.rel (%p1284) target = $region80
        $region79: #{tpu_custom_call.1} parent=47 // pred_region
          %s1288 = ssub.s32 128, 128
          %1289 = vsyncadd [#allocation6], %s1288
          %s1291 = sshll.u32 [#allocation11], 4
          %s1292 = int_to_ptr.vmem [resolvable:$true] %s1291
          %1294 = dma.vmem_to_hbm [thread:$0]  %s1292, 128, %s7, [#allocation6]
        $region80: #{tpu_custom_call.1} parent=47 // pred_fallthru
          _
        // Predicated region
        $region81: #{tpu_custom_call.1} parent=47 // pred_check
          %p1295 = pneg %p208
        $region82: #{tpu_custom_call.1} parent=47 // pred_check_branch
          %1297 = sbr.rel (%p1295) target = $region84
        $region83: #{tpu_custom_call.1} parent=47 // pred_region
          %1298 = dma.done [#allocation6], 128
        $region84: #{tpu_custom_call.1} parent=47 // pred_fallthru
          _
      $region48: #{tpu_custom_call.1} parent=5 // pred_fallthru
        _
      %p1299 = scmp.le.s32.totalorder 2, %s16
      // Predicated region
      $region85: #{tpu_custom_call.1} parent=5 // pred_check
        %p1300 = pneg %p1299
      $region86: #{tpu_custom_call.1} parent=5 // pred_check_branch
        %1302 = sbr.rel (%p1300) target = $region88
      $region87: #{tpu_custom_call.1} parent=5 // pred_region
        %s1303 = ssub.s32 %s16, 2
      $region88: #{tpu_custom_call.1} parent=5 // pred_fallthru
        _
    $region6: #{tpu_custom_call.1} parent=1 // loop_footer
      %s20 = sadd.s32 1, %s16
    $region7: #{tpu_custom_call.1} parent=1 // loop_footer_branch
      %15 = sbr.rel target = $region3
    $region8: #{tpu_custom_call.1} parent=1 // loop_exit
      _
    %1304 = vsyncpa [#allocation5], 1
    %s1305 = scalar_lea.sflag [#allocation5], 1
    %1306 = vsyncpa %s1305, 1
    %1307 = vsyncpa [#allocation8], 1
    %1308 = vsyncpa [#allocation6], 1
    %s1309 = scalar_lea.sflag [#allocation6], 1
    %1310 = vsyncpa %s1309, 1

</llo_original>
